<compile_context>
chip_gen: v7x
topology: tpu7x:2x2x1
jax: 0.10.0
libtpu: 0.0.40
codegen_flags: <defaults>
</compile_context>

<pallas_src>
import functools
import math

import jax
import jax.numpy as jnp
from jax.experimental import pallas as pl
from jax.experimental.pallas import tpu as pltpu


def _flash_qkv_kernel(q_ref, k_ref, v_ref, o_ref, m_sc, l_sc, acc_sc, *,
                      scale, compute_dtype):
    """One (head-block, q-block, kv-block) step of legacy QKV attention.

    q_ref : (Bb, C, Tq)    k_ref / v_ref : (Bb, C, Tk)    o_ref : (Bb, C, Tq)
    Scratch: m_sc/l_sc (Bb, 1, Tq) f32 running max/sum, acc_sc (Bb, C, Tq) f32.
    """
    ki = pl.program_id(2)
    nk = pl.num_programs(2)

    @pl.when(ki == 0)
    def _init():
        m_sc[...] = jnp.full(m_sc.shape, -jnp.inf, dtype=m_sc.dtype)
        l_sc[...] = jnp.zeros(l_sc.shape, dtype=l_sc.dtype)
        acc_sc[...] = jnp.zeros(acc_sc.shape, dtype=acc_sc.dtype)

    # Fold the full 1/sqrt(ch) softmax scale into q only (the smaller operand);
    # equivalent to the reference's (q*ch^-.25)·(k*ch^-.25) within f32 rounding.
    q = q_ref[...] * scale            # (Bb, C, Tq), input dtype
    k = k_ref[...]                    # (Bb, C, Tk)
    v = v_ref[...]                    # (Bb, C, Tk)
    if compute_dtype is not None:     # optional bf16 MXU path (off by default)
        q = q.astype(compute_dtype)
        k = k.astype(compute_dtype)
        v = v.astype(compute_dtype)

    # s[b, kv, t] = sum_c k[b, c, kv] * q[b, c, t]   -> (Bb, Tk, Tq), f32 acc.
    s = jax.lax.dot_general(
        k, q,
        dimension_numbers=(((1,), (1,)), ((0,), (0,))),
        preferred_element_type=jnp.float32)

    # Online softmax over the kv (sublane) axis; stats stay lane-oriented.
    m_prev = m_sc[...]                                          # (Bb, 1, Tq)
    m_new = jnp.maximum(m_prev, jnp.max(s, axis=1, keepdims=True))
    alpha = jnp.exp(m_prev - m_new)                             # (Bb, 1, Tq)
    p = jnp.exp(s - m_new)                                      # (Bb, Tk, Tq)
    l_sc[...] = alpha * l_sc[...] + jnp.sum(p, axis=1, keepdims=True)
    m_sc[...] = m_new

    # acc[b, c, t] += sum_kv v[b, c, kv] * p[b, kv, t]  -> (Bb, C, Tq)
    p_op = p.astype(v.dtype)          # matches reference's cast of the weights
    pv = jax.lax.dot_general(
        v, p_op,
        dimension_numbers=(((2,), (1,)), ((0,), (0,))),
        preferred_element_type=jnp.float32)
    acc_sc[...] = alpha * acc_sc[...] + pv

    @pl.when(ki == nk - 1)
    def _finalize():
        # Only the tiny (Bb,1,Tq) denominator needs a reciprocal; exact is free.
        inv_l = pl.reciprocal(l_sc[...], approx=False)
        o_ref[...] = (acc_sc[...] * inv_l).astype(o_ref.dtype)


def _softmax_qkv_kernel(q_ref, k_ref, v_ref, o_ref, *, scale, compute_dtype):
    """Single-kv-block specialization: plain softmax, no scratch, no rescale."""
    q = q_ref[...] * scale            # (Bb, C, Tq)
    k = k_ref[...]                    # (Bb, C, Tk)
    v = v_ref[...]                    # (Bb, C, Tk)
    if compute_dtype is not None:
        q = q.astype(compute_dtype)
        k = k.astype(compute_dtype)
        v = v.astype(compute_dtype)

    s = jax.lax.dot_general(          # (Bb, Tk, Tq), f32
        k, q,
        dimension_numbers=(((1,), (1,)), ((0,), (0,))),
        preferred_element_type=jnp.float32)

    m = jnp.max(s, axis=1, keepdims=True)                       # (Bb, 1, Tq)
    p = jnp.exp(s - m)                                           # (Bb, Tk, Tq)
    l = jnp.sum(p, axis=1, keepdims=True)                        # (Bb, 1, Tq)
    # Normalize in f32 then cast to the input dtype, exactly like the
    # reference's softmax(weight.float()).type(weight.dtype).
    p = (p * pl.reciprocal(l, approx=False)).astype(v.dtype)

    o = jax.lax.dot_general(          # (Bb, C, Tq)
        v, p,
        dimension_numbers=(((2,), (1,)), ((0,), (0,))),
        preferred_element_type=jnp.float32)
    o_ref[...] = o.astype(o_ref.dtype)


def _largest_divisor(n, candidates, fallback):
    for c in candidates:
        if n % c == 0:
            return c
    return fallback


def qkv_attention_legacy(qkv, n_heads, *, block_q=None, block_kv=None,
                         prefer_bf16_matmul=False):
    """JAX/Pallas equivalent of QKVAttentionLegacy(n_heads)(qkv).

    qkv: [N, H*3*C, T]  ->  returns [N, H*C, T]
    """
    bs, width, length = qkv.shape
    assert width % (3 * n_heads) == 0
    ch = width // (3 * n_heads)
    scale = 1.0 / math.sqrt(ch)       # == (ch**-0.25)**2, folded onto q only

    b_total = bs * n_heads
    qkv_r = qkv.reshape(b_total, 3 * ch, length)
    dtype = qkv_r.dtype
    itemsize = jnp.dtype(dtype).itemsize

    # q/k/v blocks are carved at channel offsets 0, ch, 2*ch along the sublane
    # axis; keep them (8,128)-aligned so they stay plain DMA views.
    assert ch % 8 == 0, (
        "QKVAttentionLegacy Pallas kernel requires the per-head channel "
        f"count to be a multiple of 8 (got {ch})")
    # TODO(synk): pad the channel axis instead of asserting for exotic head dims.

    # ---- sequence tiling (flash-style over the kv axis, plus q tiling) ----
    if block_q is not None:
        tq = block_q
    elif length % 128 == 0:
        tq = _largest_divisor(length, (256, 128), length)
    else:
        tq = length                    # small/odd T: single block, no masking
    if block_kv is not None:
        tk = block_kv
    elif length % 128 == 0:
        tk = _largest_divisor(length, (512, 256, 128), length)
    else:
        tk = length
    assert length % tq == 0 and length % tk == 0
    assert tq == length or tq % 128 == 0
    assert tk == length or tk % 128 == 0

    # Batch several (batch*head) slices per grid step to amortize the ~0.35us
    # per-step overhead, but stay well inside scoped VMEM on all generations
    # (v5e default scoped VMEM is only 16 MiB; v7x physical is 64 MiB per TC).
    bb = _largest_divisor(b_total, (8, 4, 2), 1)

    def _vmem_estimate(b):
        scores = 2 * b * tk * tq * 4                       # s and p live in f32
        kv_in = 2 * 2 * b * ch * tk * itemsize             # K,V double-buffered
        q_out = 2 * 2 * b * ch * tq * itemsize             # Q in + O out
        scratch = b * (ch + 16) * max(tq, 128) * 4         # acc + m + l (padded)
        return scores + kv_in + q_out + scratch

    while bb > 1 and _vmem_estimate(bb) > 12 * 1024 * 1024:
        bb //= 2

    nk = length // tk
    grid = (b_total // bb, length // tq, nk)

    compute_dtype = jnp.bfloat16 if (prefer_bf16_matmul and
                                     dtype == jnp.float32) else None

    if nk == 1:
        kernel = functools.partial(_softmax_qkv_kernel, scale=scale,
                                   compute_dtype=compute_dtype)
        scratch_shapes = []
    else:
        kernel = functools.partial(_flash_qkv_kernel, scale=scale,
                                   compute_dtype=compute_dtype)
        scratch_shapes = [
            pltpu.VMEM((bb, 1, tq), jnp.float32),    # running max
            pltpu.VMEM((bb, 1, tq), jnp.float32),    # running sum
            pltpu.VMEM((bb, ch, tq), jnp.float32),   # output accumulator
        ]

    cost = pl.CostEstimate(
        flops=4 * b_total * length * length * ch,           # two matmuls
        transcendentals=b_total * length * length,          # exp
        bytes_accessed=4 * b_total * ch * length * itemsize)

    out = pl.pallas_call(
        kernel,
        out_shape=jax.ShapeDtypeStruct((b_total, ch, length), dtype),
        grid_spec=pltpu.PrefetchScalarGridSpec(
            num_scalar_prefetch=0,
            grid=grid,
            in_specs=[
                # q / k / v are channel blocks 0 / 1 / 2 of the same array.
                pl.BlockSpec((bb, ch, tq), lambda b, qi, ki: (b, 0, qi)),
                pl.BlockSpec((bb, ch, tk), lambda b, qi, ki: (b, 1, ki)),
                pl.BlockSpec((bb, ch, tk), lambda b, qi, ki: (b, 2, ki)),
            ],
            out_specs=pl.BlockSpec((bb, ch, tq), lambda b, qi, ki: (b, 0, qi)),
            scratch_shapes=scratch_shapes),
        compiler_params=pltpu.CompilerParams(
            dimension_semantics=("parallel", "parallel", "arbitrary"),
            vmem_limit_bytes=32 * 1024 * 1024),
        cost_estimate=cost,
    )(qkv_r, qkv_r, qkv_r)

    return out.reshape(bs, n_heads * ch, length)


def _reference(qkv, n_heads):
    """Pure-JAX reference mirroring the PyTorch module line-by-line."""
    bs, width, length = qkv.shape
    ch = width // (3 * n_heads)
    qkv_r = qkv.reshape(bs * n_heads, 3 * ch, length)
    q, k, v = qkv_r[:, :ch], qkv_r[:, ch:2 * ch], qkv_r[:, 2 * ch:]
    scale = 1.0 / math.sqrt(math.sqrt(ch))
    weight = jnp.einsum('bct,bcs->bts', q * scale, k * scale)
    weight = jax.nn.softmax(weight.astype(jnp.float32), axis=-1).astype(weight.dtype)
    a = jnp.einsum('bts,bcs->bct', weight, v)
    return a.reshape(bs, -1, length)


if __name__ == "__main__":
    key = jax.random.PRNGKey(0)
    k1, k2 = jax.random.split(key)

    # Case 1: small shapes straight from the module's docstring regime
    # (single kv block -> specialized softmax kernel).
    n_heads = 2
    N, C, T = 2, 8, 16                       # qkv width = H * 3 * C = 48
    qkv1 = jax.random.normal(k1, (N, n_heads * 3 * C, T), dtype=jnp.float32)
    out1 = jax.block_until_ready(qkv_attention_legacy(qkv1, n_heads))
    ref1 = _reference(qkv1, n_heads)
    assert out1.shape == (N, n_heads * C, T)
    assert jnp.allclose(out1, ref1, atol=1e-4, rtol=1e-4)

    # Case 2: exercises the flash-style multi-block q/kv path (nq=2, nk=2).
    n_heads2, N2, C2, T2 = 2, 1, 8, 256
    qkv2 = jax.random.normal(k2, (N2, n_heads2 * 3 * C2, T2), dtype=jnp.float32)
    out2 = jax.block_until_ready(
        qkv_attention_legacy(qkv2, n_heads2, block_q=128, block_kv=128))
    ref2 = _reference(qkv2, n_heads2)
    assert out2.shape == (N2, n_heads2 * C2, T2)
    assert jnp.allclose(out2, ref2, atol=1e-4, rtol=1e-4)

    print("KERNEL_OK")
</pallas_src>

<mosaic_0001>
module attributes {stable_mosaic.version = 11 : i64} {
  func.func @_softmax_qkv_kernel(%arg0: i32, %arg1: i32, %arg2: i32, %arg3: memref<4x8x16xf32, #tpu.memory_space<vmem>>, %arg4: memref<4x8x16xf32, #tpu.memory_space<vmem>>, %arg5: memref<4x8x16xf32, #tpu.memory_space<vmem>>, %arg6: memref<4x8x16xf32, #tpu.memory_space<vmem>>) attributes {dimension_semantics = [#tpu.dimension_semantics<parallel>, #tpu.dimension_semantics<parallel>, #tpu.dimension_semantics<arbitrary>], iteration_bounds = array<i64: 1, 1, 1>, scalar_prefetch = 0 : i64, scratch_operands = 0 : i64, tpu.core_type = #tpu.core_type<tc>, window_params = [{transform_indices = @transform_0, window_bounds = array<i64: 4, 8, 16>}, {transform_indices = @transform_1, window_bounds = array<i64: 4, 8, 16>}, {transform_indices = @transform_2, window_bounds = array<i64: 4, 8, 16>}, {transform_indices = @transform_3, window_bounds = array<i64: 4, 8, 16>}]} {
    %c0 = arith.constant 0 : index
    %c0_0 = arith.constant 0 : index
    %c0_1 = arith.constant 0 : index
    %0 = vector.load %arg3[%c0, %c0_0, %c0_1] : memref<4x8x16xf32, #tpu.memory_space<vmem>>, vector<4x8x16xf32>
    %cst = arith.constant 0.353553385 : f32
    %1 = vector.broadcast %cst : f32 to vector<4x8x16xf32>
    %2 = arith.mulf %0, %1 : vector<4x8x16xf32>
    %c0_2 = arith.constant 0 : index
    %c0_3 = arith.constant 0 : index
    %c0_4 = arith.constant 0 : index
    %3 = vector.load %arg4[%c0_2, %c0_3, %c0_4] : memref<4x8x16xf32, #tpu.memory_space<vmem>>, vector<4x8x16xf32>
    %c0_5 = arith.constant 0 : index
    %c0_6 = arith.constant 0 : index
    %c0_7 = arith.constant 0 : index
    %4 = vector.load %arg5[%c0_5, %c0_6, %c0_7] : memref<4x8x16xf32, #tpu.memory_space<vmem>>, vector<4x8x16xf32>
    %cst_8 = arith.constant dense<0.000000e+00> : vector<4x16x16xf32>
    %5 = tpu.matmul %3, %2, %cst_8 {dimension_numbers = #tpu.dot_dimension_numbers<[1], [1], [2], [2], [0, 0, 0, 2, 1, 2], [0], [0]>} : vector<4x8x16xf32>, vector<4x8x16xf32>, vector<4x16x16xf32> -> vector<4x16x16xf32>
    %cst_9 = arith.constant dense<0xFF800000> : vector<4x16xf32>
    %6 = vector.multi_reduction <maximumf>, %5, %cst_9 [1] : vector<4x16x16xf32> to vector<4x16xf32>
    %7 = vector.shape_cast %6 : vector<4x16xf32> to vector<4x1x16xf32>
    %8 = vector.broadcast %7 : vector<4x1x16xf32> to vector<4x16x16xf32>
    %9 = arith.subf %5, %8 : vector<4x16x16xf32>
    %10 = math.exp %9 : vector<4x16x16xf32>
    %cst_10 = arith.constant dense<0.000000e+00> : vector<4x16xf32>
    %11 = vector.multi_reduction <add>, %10, %cst_10 [1] : vector<4x16x16xf32> to vector<4x16xf32>
    %12 = vector.shape_cast %11 : vector<4x16xf32> to vector<4x1x16xf32>
    %13 = tpu.reciprocal %12 : vector<4x1x16xf32> -> vector<4x1x16xf32>
    %14 = vector.broadcast %13 : vector<4x1x16xf32> to vector<4x16x16xf32>
    %15 = arith.mulf %10, %14 : vector<4x16x16xf32>
    %cst_11 = arith.constant dense<0.000000e+00> : vector<4x8x16xf32>
    %16 = tpu.matmul %4, %15, %cst_11 {dimension_numbers = #tpu.dot_dimension_numbers<[2], [1], [1], [2], [0, 0, 0, 1, 1, 2], [0], [0]>} : vector<4x8x16xf32>, vector<4x16x16xf32>, vector<4x8x16xf32> -> vector<4x8x16xf32>
    %c0_12 = arith.constant 0 : index
    %c0_13 = arith.constant 0 : index
    %c0_14 = arith.constant 0 : index
    %17 = vector.load %arg6[%c0_12, %c0_13, %c0_14] : memref<4x8x16xf32, #tpu.memory_space<vmem>>, vector<4x8x16xf32>
    tpu.vector_store %arg6[%c0_12, %c0_13, %c0_14], %16 {strides = array<i32>} : memref<4x8x16xf32, #tpu.memory_space<vmem>>, vector<4x8x16xf32>,
    return
  }
  func.func @transform_0(%arg0: i32, %arg1: i32, %arg2: i32) -> (i32, i32, i32) {
    %c0_i32 = arith.constant 0 : i32
    %c0_i32_0 = arith.constant 0 : i32
    return %arg0, %c0_i32, %arg1 : i32, i32, i32
  }
  func.func @transform_1(%arg0: i32, %arg1: i32, %arg2: i32) -> (i32, i32, i32) {
    %c1_i32 = arith.constant 1 : i32
    %c0_i32 = arith.constant 0 : i32
    return %arg0, %c1_i32, %arg2 : i32, i32, i32
  }
  func.func @transform_2(%arg0: i32, %arg1: i32, %arg2: i32) -> (i32, i32, i32) {
    %c2_i32 = arith.constant 2 : i32
    %c0_i32 = arith.constant 0 : i32
    return %arg0, %c2_i32, %arg2 : i32, i32, i32
  }
  func.func @transform_3(%arg0: i32, %arg1: i32, %arg2: i32) -> (i32, i32, i32) {
    %c0_i32 = arith.constant 0 : i32
    %c0_i32_0 = arith.constant 0 : i32
    return %arg0, %c0_i32, %arg1 : i32, i32, i32
  }
}

</mosaic_0001>

<llo_original>
// kernel: tpu_custom_call.1
$region0: #{tpu_custom_call.1}
  #allocation0 [shape = 'u32[]', space=smem, size = 0x4, offset = 0x4, fixed_abs, tag = 'smem constant byte address 0x4 - core index']
  #allocation1 [shape = 'u32[144,128]{1,0:T(1,128)}', space=vmem, size = 0x12000, scoped, tag = 'internal scratch']
  %s0 = inlined_call_operand.vmem [shape: f32[4,24,16], index: 0, kind: input, shape index: {}]
  %s1 = inlined_call_operand.vmem [shape: f32[4,24,16], index: 1, kind: input, shape index: {}]
  %s2 = inlined_call_operand.vmem [shape: f32[4,24,16], index: 2, kind: input, shape index: {}]
  %s3 = inlined_call_operand.hbm [shape: f32[4,8,16], index: 3, kind: output, shape index: {}]
  %s4 = sld [smem:[#allocation0]]
  $region136: #{tpu_custom_call.1} parent=0
    _
  %s6 = ssub.s32 1, %s4
  %s7 = scalar_select 0, %s6, %s4
  $region1: #{tpu_custom_call.1} parent=0
    #allocation2 [shape = 'u8[16384]{0}', space=vmem, size = 0x4000, scoped, tag = 'input window, operand 0, single buffered']
    #allocation3 [shape = 'u8[16384]{0}', space=vmem, size = 0x4000, scoped, tag = 'input window, operand 1, single buffered']
    #allocation4 [shape = 'u8[16384]{0}', space=vmem, size = 0x4000, scoped, tag = 'input window, operand 2, single buffered']
    #allocation5 [shape = 'u8[16384]{0}', space=vmem, size = 0x4000, scoped, tag = 'output window, operand 0, single buffered']
    #allocation6 [shape = 's32[1]{0}', space=sflag, size = 0x4, scoped, tag = 'scoped memory for tpu_custom_call.1']
    %8 = vsyncpa [#allocation6], 0
    // Predicated region
    $region2: #{tpu_custom_call.1} parent=1 // pred_check
      _
    $region3: #{tpu_custom_call.1} parent=1 // pred_check_branch
      %10 = sbr.rel (0) target = $region5
    $region4: #{tpu_custom_call.1} parent=1 // pred_region
      // Predicated region
      $region6: #{tpu_custom_call.1} parent=4 // pred_check
        _
      $region7: #{tpu_custom_call.1} parent=4 // pred_check_branch
        %12 = sbr.rel (0) target = $region9
      $region8: #{tpu_custom_call.1} parent=4 // pred_region
        // Predicated region
        $region10: #{tpu_custom_call.1} parent=8 // pred_check
          _
        $region11: #{tpu_custom_call.1} parent=8 // pred_check_branch
          %14 = sbr.rel (0) target = $region13
        $region12: #{tpu_custom_call.1} parent=8 // pred_region
          // Predicated region
          $region25: #{tpu_custom_call.1} parent=12 // pred_check
            _
          $region26: #{tpu_custom_call.1} parent=12 // pred_check_branch
            %35 = sbr.rel (0) target = $region28
          $region27: #{tpu_custom_call.1} parent=12 // pred_region
            loop: start=0, step=1, limit=1
            $region29: #{tpu_custom_call.1} parent=27 // loop_pre_header
              _
            $region30: #{tpu_custom_call.1} parent=27 // loop_header
              %s37 = sphi 0, %s41
              %p38 = scmp.ge.s32.totalorder %s37, 1
              %s42 = sphi %s0, %s0
              %s43 = sphi [#allocation2], [#allocation2]
            $region31: #{tpu_custom_call.1} parent=27 // loop_header_branch
              %40 = sbr.rel (%p38) target = $region35
            $region32: #{tpu_custom_call.1} parent=27 // loop_body
              %v44 = vld [vmem:[%s42] sm:$0xff]
              %45 = vst [vmem:[%s43] sm:$0xff] %v44
              %v46 = vld [vmem:[%s42 + $0x18] sm:$0xff]
              %47 = vst [vmem:[%s43 + $0x8] sm:$0xff] %v46
              %v48 = vld [vmem:[%s42 + $0x30] sm:$0xff]
              %49 = vst [vmem:[%s43 + $0x10] sm:$0xff] %v48
              %v50 = vld [vmem:[%s42 + $0x48] sm:$0xff]
              %51 = vst [vmem:[%s43 + $0x18] sm:$0xff] %v50
            $region33: #{tpu_custom_call.1} parent=27 // loop_footer
              %s41 = sadd.s32 1, %s37
            $region34: #{tpu_custom_call.1} parent=27 // loop_footer_branch
              %36 = sbr.rel target = $region30
            $region35: #{tpu_custom_call.1} parent=27 // loop_exit
              _
          $region28: #{tpu_custom_call.1} parent=12 // pred_fallthru
            _
          // Predicated region
          $region36: #{tpu_custom_call.1} parent=12 // pred_check
            _
          $region37: #{tpu_custom_call.1} parent=12 // pred_check_branch
            %53 = sbr.rel target = $region39
          $region38: #{tpu_custom_call.1} parent=12 // pred_region
            _
          $region39: #{tpu_custom_call.1} parent=12 // pred_fallthru
            _
        $region13: #{tpu_custom_call.1} parent=8 // pred_fallthru
          _
        // Predicated region
        $region14: #{tpu_custom_call.1} parent=8 // pred_check
          _
        $region15: #{tpu_custom_call.1} parent=8 // pred_check_branch
          %16 = sbr.rel target = $region17
        $region16: #{tpu_custom_call.1} parent=8 // pred_region
          loop: start=0, step=1, limit=1
          $region18: #{tpu_custom_call.1} parent=16 // loop_pre_header
            _
          $region19: #{tpu_custom_call.1} parent=16 // loop_header
            %s19 = sphi 0, %s23
            %p20 = scmp.ge.s32.totalorder %s19, 1
            %s24 = sphi %s0, %s0
            %s25 = sphi [#allocation2], [#allocation2]
          $region20: #{tpu_custom_call.1} parent=16 // loop_header_branch
            %22 = sbr.rel (%p20) target = $region24
          $region21: #{tpu_custom_call.1} parent=16 // loop_body
            %v26 = vld [vmem:[%s24] sm:$0xff]
            %27 = vst [vmem:[%s25] sm:$0xff] %v26
            %v28 = vld [vmem:[%s24 + $0x18] sm:$0xff]
            %29 = vst [vmem:[%s25 + $0x8] sm:$0xff] %v28
            %v30 = vld [vmem:[%s24 + $0x30] sm:$0xff]
            %31 = vst [vmem:[%s25 + $0x10] sm:$0xff] %v30
            %v32 = vld [vmem:[%s24 + $0x48] sm:$0xff]
            %33 = vst [vmem:[%s25 + $0x18] sm:$0xff] %v32
          $region22: #{tpu_custom_call.1} parent=16 // loop_footer
            %s23 = sadd.s32 1, %s19
          $region23: #{tpu_custom_call.1} parent=16 // loop_footer_branch
            %18 = sbr.rel target = $region19
          $region24: #{tpu_custom_call.1} parent=16 // loop_exit
            _
        $region17: #{tpu_custom_call.1} parent=8 // pred_fallthru
          _
      $region9: #{tpu_custom_call.1} parent=4 // pred_fallthru
        _
      %54 = vnop
    $region5: #{tpu_custom_call.1} parent=1 // pred_fallthru
      _
    // Predicated region
    $region40: #{tpu_custom_call.1} parent=1 // pred_check
      _
    $region41: #{tpu_custom_call.1} parent=1 // pred_check_branch
      %56 = sbr.rel (0) target = $region43
    $region42: #{tpu_custom_call.1} parent=1 // pred_region
      %s57 = scalar_lea.vmem %s1, 8
      // Predicated region
      $region44: #{tpu_custom_call.1} parent=42 // pred_check
        _
      $region45: #{tpu_custom_call.1} parent=42 // pred_check_branch
        %59 = sbr.rel (0) target = $region47
      $region46: #{tpu_custom_call.1} parent=42 // pred_region
        // Predicated region
        $region48: #{tpu_custom_call.1} parent=46 // pred_check
          _
        $region49: #{tpu_custom_call.1} parent=46 // pred_check_branch
          %61 = sbr.rel (0) target = $region51
        $region50: #{tpu_custom_call.1} parent=46 // pred_region
          // Predicated region
          $region63: #{tpu_custom_call.1} parent=50 // pred_check
            _
          $region64: #{tpu_custom_call.1} parent=50 // pred_check_branch
            %82 = sbr.rel (0) target = $region66
          $region65: #{tpu_custom_call.1} parent=50 // pred_region
            loop: start=0, step=1, limit=1
            $region67: #{tpu_custom_call.1} parent=65 // loop_pre_header
              _
            $region68: #{tpu_custom_call.1} parent=65 // loop_header
              %s84 = sphi 0, %s88
              %p85 = scmp.ge.s32.totalorder %s84, 1
              %s89 = sphi %s57, %s57
              %s90 = sphi [#allocation3], [#allocation3]
            $region69: #{tpu_custom_call.1} parent=65 // loop_header_branch
              %87 = sbr.rel (%p85) target = $region73
            $region70: #{tpu_custom_call.1} parent=65 // loop_body
              %v91 = vld [vmem:[%s89] sm:$0xff]
              %92 = vst [vmem:[%s90] sm:$0xff] %v91
              %v93 = vld [vmem:[%s89 + $0x18] sm:$0xff]
              %94 = vst [vmem:[%s90 + $0x8] sm:$0xff] %v93
              %v95 = vld [vmem:[%s89 + $0x30] sm:$0xff]
              %96 = vst [vmem:[%s90 + $0x10] sm:$0xff] %v95
              %v97 = vld [vmem:[%s89 + $0x48] sm:$0xff]
              %98 = vst [vmem:[%s90 + $0x18] sm:$0xff] %v97
            $region71: #{tpu_custom_call.1} parent=65 // loop_footer
              %s88 = sadd.s32 1, %s84
            $region72: #{tpu_custom_call.1} parent=65 // loop_footer_branch
              %83 = sbr.rel target = $region68
            $region73: #{tpu_custom_call.1} parent=65 // loop_exit
              _
          $region66: #{tpu_custom_call.1} parent=50 // pred_fallthru
            _
          // Predicated region
          $region74: #{tpu_custom_call.1} parent=50 // pred_check
            _
          $region75: #{tpu_custom_call.1} parent=50 // pred_check_branch
            %100 = sbr.rel target = $region77
          $region76: #{tpu_custom_call.1} parent=50 // pred_region
            _
          $region77: #{tpu_custom_call.1} parent=50 // pred_fallthru
            _
        $region51: #{tpu_custom_call.1} parent=46 // pred_fallthru
          _
        // Predicated region
        $region52: #{tpu_custom_call.1} parent=46 // pred_check
          _
        $region53: #{tpu_custom_call.1} parent=46 // pred_check_branch
          %63 = sbr.rel target = $region55
        $region54: #{tpu_custom_call.1} parent=46 // pred_region
          loop: start=0, step=1, limit=1
          $region56: #{tpu_custom_call.1} parent=54 // loop_pre_header
            _
          $region57: #{tpu_custom_call.1} parent=54 // loop_header
            %s66 = sphi 0, %s70
            %p67 = scmp.ge.s32.totalorder %s66, 1
            %s71 = sphi %s57, %s57
            %s72 = sphi [#allocation3], [#allocation3]
          $region58: #{tpu_custom_call.1} parent=54 // loop_header_branch
            %69 = sbr.rel (%p67) target = $region62
          $region59: #{tpu_custom_call.1} parent=54 // loop_body
            %v73 = vld [vmem:[%s71] sm:$0xff]
            %74 = vst [vmem:[%s72] sm:$0xff] %v73
            %v75 = vld [vmem:[%s71 + $0x18] sm:$0xff]
            %76 = vst [vmem:[%s72 + $0x8] sm:$0xff] %v75
            %v77 = vld [vmem:[%s71 + $0x30] sm:$0xff]
            %78 = vst [vmem:[%s72 + $0x10] sm:$0xff] %v77
            %v79 = vld [vmem:[%s71 + $0x48] sm:$0xff]
            %80 = vst [vmem:[%s72 + $0x18] sm:$0xff] %v79
          $region60: #{tpu_custom_call.1} parent=54 // loop_footer
            %s70 = sadd.s32 1, %s66
          $region61: #{tpu_custom_call.1} parent=54 // loop_footer_branch
            %65 = sbr.rel target = $region57
          $region62: #{tpu_custom_call.1} parent=54 // loop_exit
            _
        $region55: #{tpu_custom_call.1} parent=46 // pred_fallthru
          _
      $region47: #{tpu_custom_call.1} parent=42 // pred_fallthru
        _
      %101 = vnop
    $region43: #{tpu_custom_call.1} parent=1 // pred_fallthru
      _
    // Predicated region
    $region78: #{tpu_custom_call.1} parent=1 // pred_check
      _
    $region79: #{tpu_custom_call.1} parent=1 // pred_check_branch
      %103 = sbr.rel (0) target = $region81
    $region80: #{tpu_custom_call.1} parent=1 // pred_region
      %s104 = scalar_lea.vmem %s2, 16
      // Predicated region
      $region82: #{tpu_custom_call.1} parent=80 // pred_check
        _
      $region83: #{tpu_custom_call.1} parent=80 // pred_check_branch
        %106 = sbr.rel (0) target = $region85
      $region84: #{tpu_custom_call.1} parent=80 // pred_region
        // Predicated region
        $region86: #{tpu_custom_call.1} parent=84 // pred_check
          _
        $region87: #{tpu_custom_call.1} parent=84 // pred_check_branch
          %108 = sbr.rel (0) target = $region89
        $region88: #{tpu_custom_call.1} parent=84 // pred_region
          // Predicated region
          $region101: #{tpu_custom_call.1} parent=88 // pred_check
            _
          $region102: #{tpu_custom_call.1} parent=88 // pred_check_branch
            %129 = sbr.rel (0) target = $region104
          $region103: #{tpu_custom_call.1} parent=88 // pred_region
            loop: start=0, step=1, limit=1
            $region105: #{tpu_custom_call.1} parent=103 // loop_pre_header
              _
            $region106: #{tpu_custom_call.1} parent=103 // loop_header
              %s131 = sphi 0, %s135
              %p132 = scmp.ge.s32.totalorder %s131, 1
              %s136 = sphi %s104, %s104
              %s137 = sphi [#allocation4], [#allocation4]
            $region107: #{tpu_custom_call.1} parent=103 // loop_header_branch
              %134 = sbr.rel (%p132) target = $region111
            $region108: #{tpu_custom_call.1} parent=103 // loop_body
              %v138 = vld [vmem:[%s136] sm:$0xff]
              %139 = vst [vmem:[%s137] sm:$0xff] %v138
              %v140 = vld [vmem:[%s136 + $0x18] sm:$0xff]
              %141 = vst [vmem:[%s137 + $0x8] sm:$0xff] %v140
              %v142 = vld [vmem:[%s136 + $0x30] sm:$0xff]
              %143 = vst [vmem:[%s137 + $0x10] sm:$0xff] %v142
              %v144 = vld [vmem:[%s136 + $0x48] sm:$0xff]
              %145 = vst [vmem:[%s137 + $0x18] sm:$0xff] %v144
            $region109: #{tpu_custom_call.1} parent=103 // loop_footer
              %s135 = sadd.s32 1, %s131
            $region110: #{tpu_custom_call.1} parent=103 // loop_footer_branch
              %130 = sbr.rel target = $region106
            $region111: #{tpu_custom_call.1} parent=103 // loop_exit
              _
          $region104: #{tpu_custom_call.1} parent=88 // pred_fallthru
            _
          // Predicated region
          $region112: #{tpu_custom_call.1} parent=88 // pred_check
            _
          $region113: #{tpu_custom_call.1} parent=88 // pred_check_branch
            %147 = sbr.rel target = $region115
          $region114: #{tpu_custom_call.1} parent=88 // pred_region
            _
          $region115: #{tpu_custom_call.1} parent=88 // pred_fallthru
            _
        $region89: #{tpu_custom_call.1} parent=84 // pred_fallthru
          _
        // Predicated region
        $region90: #{tpu_custom_call.1} parent=84 // pred_check
          _
        $region91: #{tpu_custom_call.1} parent=84 // pred_check_branch
          %110 = sbr.rel target = $region93
        $region92: #{tpu_custom_call.1} parent=84 // pred_region
          loop: start=0, step=1, limit=1
          $region94: #{tpu_custom_call.1} parent=92 // loop_pre_header
            _
          $region95: #{tpu_custom_call.1} parent=92 // loop_header
            %s113 = sphi 0, %s117
            %p114 = scmp.ge.s32.totalorder %s113, 1
            %s118 = sphi %s104, %s104
            %s119 = sphi [#allocation4], [#allocation4]
          $region96: #{tpu_custom_call.1} parent=92 // loop_header_branch
            %116 = sbr.rel (%p114) target = $region100
          $region97: #{tpu_custom_call.1} parent=92 // loop_body
            %v120 = vld [vmem:[%s118] sm:$0xff]
            %121 = vst [vmem:[%s119] sm:$0xff] %v120
            %v122 = vld [vmem:[%s118 + $0x18] sm:$0xff]
            %123 = vst [vmem:[%s119 + $0x8] sm:$0xff] %v122
            %v124 = vld [vmem:[%s118 + $0x30] sm:$0xff]
            %125 = vst [vmem:[%s119 + $0x10] sm:$0xff] %v124
            %v126 = vld [vmem:[%s118 + $0x48] sm:$0xff]
            %127 = vst [vmem:[%s119 + $0x18] sm:$0xff] %v126
          $region98: #{tpu_custom_call.1} parent=92 // loop_footer
            %s117 = sadd.s32 1, %s113
          $region99: #{tpu_custom_call.1} parent=92 // loop_footer_branch
            %112 = sbr.rel target = $region95
          $region100: #{tpu_custom_call.1} parent=92 // loop_exit
            _
        $region93: #{tpu_custom_call.1} parent=84 // pred_fallthru
          _
      $region85: #{tpu_custom_call.1} parent=80 // pred_fallthru
        _
      %148 = vnop
    $region81: #{tpu_custom_call.1} parent=1 // pred_fallthru
      _
    // Predicated region
    $region116: #{tpu_custom_call.1} parent=1 // pred_check
      _
    $region117: #{tpu_custom_call.1} parent=1 // pred_check_branch
      %150 = sbr.rel (0) target = $region119
    $region118: #{tpu_custom_call.1} parent=1 // pred_region
      _
    $region119: #{tpu_custom_call.1} parent=1 // pred_fallthru
      _
    // Predicated region
    $region120: #{tpu_custom_call.1} parent=1 // pred_check
      _
    $region121: #{tpu_custom_call.1} parent=1 // pred_check_branch
      %152 = sbr.rel (0) target = $region123
    $region122: #{tpu_custom_call.1} parent=1 // pred_region
      _
    $region123: #{tpu_custom_call.1} parent=1 // pred_fallthru
      _
    // Predicated region
    $region124: #{tpu_custom_call.1} parent=1 // pred_check
      _
    $region125: #{tpu_custom_call.1} parent=1 // pred_check_branch
      %154 = sbr.rel (0) target = $region127
    $region126: #{tpu_custom_call.1} parent=1 // pred_region
      _
    $region127: #{tpu_custom_call.1} parent=1 // pred_fallthru
      _
    %v155 = vld [vmem:[#allocation2] sm:$0xff]
    %v156 = vld [vmem:[#allocation2 + $0x8] sm:$0xff]
    %v157 = vld [vmem:[#allocation2 + $0x10] sm:$0xff]
    %v158 = vld [vmem:[#allocation2 + $0x18] sm:$0xff]
    %v159 = vmul.f32 %v155, 0.35355338
    %v160 = vmul.f32 %v156, 0.35355338
    %v161 = vmul.f32 %v157, 0.35355338
    %v162 = vmul.f32 %v158, 0.35355338
    %v163 = vld [vmem:[#allocation3] sm:$0xff]
    %v164 = vld [vmem:[#allocation3 + $0x8] sm:$0xff]
    %v165 = vld [vmem:[#allocation3 + $0x10] sm:$0xff]
    %v166 = vld [vmem:[#allocation3 + $0x18] sm:$0xff]
    %v167 = vld [vmem:[#allocation4] sm:$0xff]
    %v168 = vld [vmem:[#allocation4 + $0x8] sm:$0xff]
    %v169 = vld [vmem:[#allocation4 + $0x10] sm:$0xff]
    %v170 = vld [vmem:[#allocation4 + $0x18] sm:$0xff]
    %171 = vxpose.xlu0.b32.start [1/16] %v163, 128
    %172 = vxpose.xlu0.b32.cont [2/16] 0.0, 128
    %173 = vxpose.xlu0.b32.cont [3/16] 0.0, 128
    %174 = vxpose.xlu0.b32.cont [4/16] 0.0, 128
    %175 = vxpose.xlu0.b32.cont [5/16] 0.0, 128
    %176 = vxpose.xlu0.b32.cont [6/16] 0.0, 128
    %177 = vxpose.xlu0.b32.cont [7/16] 0.0, 128
    %178 = vxpose.xlu0.b32.cont [8/16] 0.0, 128
    %179 = vxpose.xlu0.b32.cont [9/16] 0.0, 128
    %180 = vxpose.xlu0.b32.cont [10/16] 0.0, 128
    %181 = vxpose.xlu0.b32.cont [11/16] 0.0, 128
    %182 = vxpose.xlu0.b32.cont [12/16] 0.0, 128
    %183 = vxpose.xlu0.b32.cont [13/16] 0.0, 128
    %184 = vxpose.xlu0.b32.cont [14/16] 0.0, 128
    %185 = vxpose.xlu0.b32.cont [15/16] 0.0, 128
    %186 = vxpose.xlu0.b32.end [16/16] 0.0, 128
    %v187 = vpop.trf.xlu0
    %v188 = vpop.trf.xlu0
    %v189 = vpop.trf.xlu0
    %v190 = vpop.trf.xlu0
    %v191 = vpop.trf.xlu0
    %v192 = vpop.trf.xlu0
    %v193 = vpop.trf.xlu0
    %v194 = vpop.trf.xlu0
    %v195 = vpop.trf.xlu0
    %v196 = vpop.trf.xlu0
    %v197 = vpop.trf.xlu0
    %v198 = vpop.trf.xlu0
    %v199 = vpop.trf.xlu0
    %v200 = vpop.trf.xlu0
    %v201 = vpop.trf.xlu0
    %v202 = vpop.trf.xlu0
    %vm203 = vcmask 64512
    %v205 = vsel %vm203, %v187, 0
    %v208 = vsel %vm203, %v188, 0
    %210 = vmatprep.subr.mxu0 0.0
    %211 = vmatpush1.msra.mxu0 %v159
    %212 = vmatprep.subr.mxu0 0.0
    %213 = vmatpush1.msra.mxu0 0.0
    %214 = vmatprep.subr.mxu0 0.0
    %215 = vmatpush1.msra.mxu0 0.0
    %216 = vmatprep.subr.mxu0 0.0
    %217 = vmatpush1.msra.mxu0 0.0
    %218 = vmatprep.subr.mxu0 0.0
    %219 = vmatpush1.msra.mxu0 0.0
    %220 = vmatprep.subr.mxu0 0.0
    %221 = vmatpush1.msra.mxu0 0.0
    %222 = vmatprep.subr.mxu0 0.0
    %223 = vmatpush1.msra.mxu0 0.0
    %224 = vmatprep.subr.mxu0 0.0
    %225 = vmatpush1.msra.mxu0 0.0
    %226 = vmatprep.subr.mxu0 0.0
    %227 = vmatpush1.msra.mxu0 0.0
    %228 = vmatprep.subr.mxu0 0.0
    %229 = vmatpush1.msra.mxu0 0.0
    %230 = vmatprep.subr.mxu0 0.0
    %231 = vmatpush1.msra.mxu0 0.0
    %232 = vmatprep.subr.mxu0 0.0
    %233 = vmatpush1.msra.mxu0 0.0
    %234 = vmatprep.subr.mxu0 0.0
    %235 = vmatpush1.msra.mxu0 0.0
    %236 = vmatprep.subr.mxu0 0.0
    %237 = vmatpush1.msra.mxu0 0.0
    %238 = vmatprep.subr.mxu0 0.0
    %239 = vmatpush1.msra.mxu0 0.0
    %240 = vmatprep.subr.mxu0 0.0
    %241 = vmatpush1.msra.mxu0 0.0
    %242 = vmatprep.subr.mxu0 0.0
    %243 = vmatpush1.msra.mxu0 0.0
    %244 = vmatprep.subr.mxu0 0.0
    %245 = vmatpush1.msra.mxu0 0.0
    %246 = vmatprep.subr.mxu0 0.0
    %247 = vmatpush1.msra.mxu0 0.0
    %248 = vmatprep.subr.mxu0 0.0
    %249 = vmatpush1.msra.mxu0 0.0
    %250 = vmatprep.subr.mxu0 0.0
    %251 = vmatpush1.msra.mxu0 0.0
    %252 = vmatprep.subr.mxu0 0.0
    %253 = vmatpush1.msra.mxu0 0.0
    %254 = vmatprep.subr.mxu0 0.0
    %255 = vmatpush1.msra.mxu0 0.0
    %256 = vmatprep.subr.mxu0 0.0
    %257 = vmatpush1.msra.mxu0 0.0
    %258 = vmatprep.subr.mxu0 0.0
    %259 = vmatpush1.msra.mxu0 0.0
    %260 = vmatprep.subr.mxu0 0.0
    %261 = vmatpush1.msra.mxu0 0.0
    %262 = vmatprep.subr.mxu0 0.0
    %263 = vmatpush1.msra.mxu0 0.0
    %264 = vmatprep.subr.mxu0 0.0
    %265 = vmatpush1.msra.mxu0 0.0
    %266 = vmatprep.subr.mxu0 0.0
    %267 = vmatpush1.msra.mxu0 0.0
    %268 = vmatprep.subr.mxu0 0.0
    %269 = vmatpush1.msra.mxu0 0.0
    %270 = vmatprep.subr.mxu0 0.0
    %271 = vmatpush1.msra.mxu0 0.0
    %272 = vmatprep.subr.mxu0 0.0
    %273 = vmatpush1.msra.mxu0 0.0
    %274 = vmatprep.mubr.f32.mxu0 0.0
    %275 = vmatmul.mubr.f32.gmra.mrb[0].mxu0 %v205
    %v276 = vpop.f32.mrb[0].mxu0
    %v277 = vadd.f32 0.0, %v276
    %v278 = vpop.f32.mrb[0].mxu0
    %279 = vmatprep.mubr.f32.mxu0 0.0
    %280 = vmatmul.mubr.f32.gmra.mrb[0].mxu0 %v208
    %v281 = vpop.f32.mrb[0].mxu0
    %v282 = vadd.f32 0.0, %v281
    %v283 = vpop.f32.mrb[0].mxu0
    %284 = vdwg.mxu0
    %285 = vxpose.xlu0.b32.start [1/16] %v164, 128
    %286 = vxpose.xlu0.b32.cont [2/16] 0.0, 128
    %287 = vxpose.xlu0.b32.cont [3/16] 0.0, 128
    %288 = vxpose.xlu0.b32.cont [4/16] 0.0, 128
    %289 = vxpose.xlu0.b32.cont [5/16] 0.0, 128
    %290 = vxpose.xlu0.b32.cont [6/16] 0.0, 128
    %291 = vxpose.xlu0.b32.cont [7/16] 0.0, 128
    %292 = vxpose.xlu0.b32.cont [8/16] 0.0, 128
    %293 = vxpose.xlu0.b32.cont [9/16] 0.0, 128
    %294 = vxpose.xlu0.b32.cont [10/16] 0.0, 128
    %295 = vxpose.xlu0.b32.cont [11/16] 0.0, 128
    %296 = vxpose.xlu0.b32.cont [12/16] 0.0, 128
    %297 = vxpose.xlu0.b32.cont [13/16] 0.0, 128
    %298 = vxpose.xlu0.b32.cont [14/16] 0.0, 128
    %299 = vxpose.xlu0.b32.cont [15/16] 0.0, 128
    %300 = vxpose.xlu0.b32.end [16/16] 0.0, 128
    %v301 = vpop.trf.xlu0
    %v302 = vpop.trf.xlu0
    %v303 = vpop.trf.xlu0
    %v304 = vpop.trf.xlu0
    %v305 = vpop.trf.xlu0
    %v306 = vpop.trf.xlu0
    %v307 = vpop.trf.xlu0
    %v308 = vpop.trf.xlu0
    %v309 = vpop.trf.xlu0
    %v310 = vpop.trf.xlu0
    %v311 = vpop.trf.xlu0
    %v312 = vpop.trf.xlu0
    %v313 = vpop.trf.xlu0
    %v314 = vpop.trf.xlu0
    %v315 = vpop.trf.xlu0
    %v316 = vpop.trf.xlu0
    %v318 = vsel %vm203, %v301, 0
    %v321 = vsel %vm203, %v302, 0
    %323 = vmatprep.subr.mxu0 0.0
    %324 = vmatpush1.msra.mxu0 %v160
    %325 = vmatprep.subr.mxu0 0.0
    %326 = vmatpush1.msra.mxu0 0.0
    %327 = vmatprep.subr.mxu0 0.0
    %328 = vmatpush1.msra.mxu0 0.0
    %329 = vmatprep.subr.mxu0 0.0
    %330 = vmatpush1.msra.mxu0 0.0
    %331 = vmatprep.subr.mxu0 0.0
    %332 = vmatpush1.msra.mxu0 0.0
    %333 = vmatprep.subr.mxu0 0.0
    %334 = vmatpush1.msra.mxu0 0.0
    %335 = vmatprep.subr.mxu0 0.0
    %336 = vmatpush1.msra.mxu0 0.0
    %337 = vmatprep.subr.mxu0 0.0
    %338 = vmatpush1.msra.mxu0 0.0
    %339 = vmatprep.subr.mxu0 0.0
    %340 = vmatpush1.msra.mxu0 0.0
    %341 = vmatprep.subr.mxu0 0.0
    %342 = vmatpush1.msra.mxu0 0.0
    %343 = vmatprep.subr.mxu0 0.0
    %344 = vmatpush1.msra.mxu0 0.0
    %345 = vmatprep.subr.mxu0 0.0
    %346 = vmatpush1.msra.mxu0 0.0
    %347 = vmatprep.subr.mxu0 0.0
    %348 = vmatpush1.msra.mxu0 0.0
    %349 = vmatprep.subr.mxu0 0.0
    %350 = vmatpush1.msra.mxu0 0.0
    %351 = vmatprep.subr.mxu0 0.0
    %352 = vmatpush1.msra.mxu0 0.0
    %353 = vmatprep.subr.mxu0 0.0
    %354 = vmatpush1.msra.mxu0 0.0
    %355 = vmatprep.subr.mxu0 0.0
    %356 = vmatpush1.msra.mxu0 0.0
    %357 = vmatprep.subr.mxu0 0.0
    %358 = vmatpush1.msra.mxu0 0.0
    %359 = vmatprep.subr.mxu0 0.0
    %360 = vmatpush1.msra.mxu0 0.0
    %361 = vmatprep.subr.mxu0 0.0
    %362 = vmatpush1.msra.mxu0 0.0
    %363 = vmatprep.subr.mxu0 0.0
    %364 = vmatpush1.msra.mxu0 0.0
    %365 = vmatprep.subr.mxu0 0.0
    %366 = vmatpush1.msra.mxu0 0.0
    %367 = vmatprep.subr.mxu0 0.0
    %368 = vmatpush1.msra.mxu0 0.0
    %369 = vmatprep.subr.mxu0 0.0
    %370 = vmatpush1.msra.mxu0 0.0
    %371 = vmatprep.subr.mxu0 0.0
    %372 = vmatpush1.msra.mxu0 0.0
    %373 = vmatprep.subr.mxu0 0.0
    %374 = vmatpush1.msra.mxu0 0.0
    %375 = vmatprep.subr.mxu0 0.0
    %376 = vmatpush1.msra.mxu0 0.0
    %377 = vmatprep.subr.mxu0 0.0
    %378 = vmatpush1.msra.mxu0 0.0
    %379 = vmatprep.subr.mxu0 0.0
    %380 = vmatpush1.msra.mxu0 0.0
    %381 = vmatprep.subr.mxu0 0.0
    %382 = vmatpush1.msra.mxu0 0.0
    %383 = vmatprep.subr.mxu0 0.0
    %384 = vmatpush1.msra.mxu0 0.0
    %385 = vmatprep.subr.mxu0 0.0
    %386 = vmatpush1.msra.mxu0 0.0
    %387 = vmatprep.mubr.f32.mxu0 0.0
    %388 = vmatmul.mubr.f32.gmra.mrb[0].mxu0 %v318
    %v389 = vpop.f32.mrb[0].mxu0
    %v390 = vadd.f32 0.0, %v389
    %v391 = vpop.f32.mrb[0].mxu0
    %392 = vmatprep.mubr.f32.mxu0 0.0
    %393 = vmatmul.mubr.f32.gmra.mrb[0].mxu0 %v321
    %v394 = vpop.f32.mrb[0].mxu0
    %v395 = vadd.f32 0.0, %v394
    %v396 = vpop.f32.mrb[0].mxu0
    %397 = vdwg.mxu0
    %398 = vxpose.xlu0.b32.start [1/16] %v165, 128
    %399 = vxpose.xlu0.b32.cont [2/16] 0.0, 128
    %400 = vxpose.xlu0.b32.cont [3/16] 0.0, 128
    %401 = vxpose.xlu0.b32.cont [4/16] 0.0, 128
    %402 = vxpose.xlu0.b32.cont [5/16] 0.0, 128
    %403 = vxpose.xlu0.b32.cont [6/16] 0.0, 128
    %404 = vxpose.xlu0.b32.cont [7/16] 0.0, 128
    %405 = vxpose.xlu0.b32.cont [8/16] 0.0, 128
    %406 = vxpose.xlu0.b32.cont [9/16] 0.0, 128
    %407 = vxpose.xlu0.b32.cont [10/16] 0.0, 128
    %408 = vxpose.xlu0.b32.cont [11/16] 0.0, 128
    %409 = vxpose.xlu0.b32.cont [12/16] 0.0, 128
    %410 = vxpose.xlu0.b32.cont [13/16] 0.0, 128
    %411 = vxpose.xlu0.b32.cont [14/16] 0.0, 128
    %412 = vxpose.xlu0.b32.cont [15/16] 0.0, 128
    %413 = vxpose.xlu0.b32.end [16/16] 0.0, 128
    %v414 = vpop.trf.xlu0
    %v415 = vpop.trf.xlu0
    %v416 = vpop.trf.xlu0
    %v417 = vpop.trf.xlu0
    %v418 = vpop.trf.xlu0
    %v419 = vpop.trf.xlu0
    %v420 = vpop.trf.xlu0
    %v421 = vpop.trf.xlu0
    %v422 = vpop.trf.xlu0
    %v423 = vpop.trf.xlu0
    %v424 = vpop.trf.xlu0
    %v425 = vpop.trf.xlu0
    %v426 = vpop.trf.xlu0
    %v427 = vpop.trf.xlu0
    %v428 = vpop.trf.xlu0
    %v429 = vpop.trf.xlu0
    %v431 = vsel %vm203, %v414, 0
    %v434 = vsel %vm203, %v415, 0
    %436 = vmatprep.subr.mxu0 0.0
    %437 = vmatpush1.msra.mxu0 %v161
    %438 = vmatprep.subr.mxu0 0.0
    %439 = vmatpush1.msra.mxu0 0.0
    %440 = vmatprep.subr.mxu0 0.0
    %441 = vmatpush1.msra.mxu0 0.0
    %442 = vmatprep.subr.mxu0 0.0
    %443 = vmatpush1.msra.mxu0 0.0
    %444 = vmatprep.subr.mxu0 0.0
    %445 = vmatpush1.msra.mxu0 0.0
    %446 = vmatprep.subr.mxu0 0.0
    %447 = vmatpush1.msra.mxu0 0.0
    %448 = vmatprep.subr.mxu0 0.0
    %449 = vmatpush1.msra.mxu0 0.0
    %450 = vmatprep.subr.mxu0 0.0
    %451 = vmatpush1.msra.mxu0 0.0
    %452 = vmatprep.subr.mxu0 0.0
    %453 = vmatpush1.msra.mxu0 0.0
    %454 = vmatprep.subr.mxu0 0.0
    %455 = vmatpush1.msra.mxu0 0.0
    %456 = vmatprep.subr.mxu0 0.0
    %457 = vmatpush1.msra.mxu0 0.0
    %458 = vmatprep.subr.mxu0 0.0
    %459 = vmatpush1.msra.mxu0 0.0
    %460 = vmatprep.subr.mxu0 0.0
    %461 = vmatpush1.msra.mxu0 0.0
    %462 = vmatprep.subr.mxu0 0.0
    %463 = vmatpush1.msra.mxu0 0.0
    %464 = vmatprep.subr.mxu0 0.0
    %465 = vmatpush1.msra.mxu0 0.0
    %466 = vmatprep.subr.mxu0 0.0
    %467 = vmatpush1.msra.mxu0 0.0
    %468 = vmatprep.subr.mxu0 0.0
    %469 = vmatpush1.msra.mxu0 0.0
    %470 = vmatprep.subr.mxu0 0.0
    %471 = vmatpush1.msra.mxu0 0.0
    %472 = vmatprep.subr.mxu0 0.0
    %473 = vmatpush1.msra.mxu0 0.0
    %474 = vmatprep.subr.mxu0 0.0
    %475 = vmatpush1.msra.mxu0 0.0
    %476 = vmatprep.subr.mxu0 0.0
    %477 = vmatpush1.msra.mxu0 0.0
    %478 = vmatprep.subr.mxu0 0.0
    %479 = vmatpush1.msra.mxu0 0.0
    %480 = vmatprep.subr.mxu0 0.0
    %481 = vmatpush1.msra.mxu0 0.0
    %482 = vmatprep.subr.mxu0 0.0
    %483 = vmatpush1.msra.mxu0 0.0
    %484 = vmatprep.subr.mxu0 0.0
    %485 = vmatpush1.msra.mxu0 0.0
    %486 = vmatprep.subr.mxu0 0.0
    %487 = vmatpush1.msra.mxu0 0.0
    %488 = vmatprep.subr.mxu0 0.0
    %489 = vmatpush1.msra.mxu0 0.0
    %490 = vmatprep.subr.mxu0 0.0
    %491 = vmatpush1.msra.mxu0 0.0
    %492 = vmatprep.subr.mxu0 0.0
    %493 = vmatpush1.msra.mxu0 0.0
    %494 = vmatprep.subr.mxu0 0.0
    %495 = vmatpush1.msra.mxu0 0.0
    %496 = vmatprep.subr.mxu0 0.0
    %497 = vmatpush1.msra.mxu0 0.0
    %498 = vmatprep.subr.mxu0 0.0
    %499 = vmatpush1.msra.mxu0 0.0
    %500 = vmatprep.mubr.f32.mxu0 0.0
    %501 = vmatmul.mubr.f32.gmra.mrb[0].mxu0 %v431
    %v502 = vpop.f32.mrb[0].mxu0
    %v503 = vadd.f32 0.0, %v502
    %v504 = vpop.f32.mrb[0].mxu0
    %505 = vmatprep.mubr.f32.mxu0 0.0
    %506 = vmatmul.mubr.f32.gmra.mrb[0].mxu0 %v434
    %v507 = vpop.f32.mrb[0].mxu0
    %v508 = vadd.f32 0.0, %v507
    %v509 = vpop.f32.mrb[0].mxu0
    %510 = vdwg.mxu0
    %511 = vxpose.xlu0.b32.start [1/16] %v166, 128
    %512 = vxpose.xlu0.b32.cont [2/16] 0.0, 128
    %513 = vxpose.xlu0.b32.cont [3/16] 0.0, 128
    %514 = vxpose.xlu0.b32.cont [4/16] 0.0, 128
    %515 = vxpose.xlu0.b32.cont [5/16] 0.0, 128
    %516 = vxpose.xlu0.b32.cont [6/16] 0.0, 128
    %517 = vxpose.xlu0.b32.cont [7/16] 0.0, 128
    %518 = vxpose.xlu0.b32.cont [8/16] 0.0, 128
    %519 = vxpose.xlu0.b32.cont [9/16] 0.0, 128
    %520 = vxpose.xlu0.b32.cont [10/16] 0.0, 128
    %521 = vxpose.xlu0.b32.cont [11/16] 0.0, 128
    %522 = vxpose.xlu0.b32.cont [12/16] 0.0, 128
    %523 = vxpose.xlu0.b32.cont [13/16] 0.0, 128
    %524 = vxpose.xlu0.b32.cont [14/16] 0.0, 128
    %525 = vxpose.xlu0.b32.cont [15/16] 0.0, 128
    %526 = vxpose.xlu0.b32.end [16/16] 0.0, 128
    %v527 = vpop.trf.xlu0
    %v528 = vpop.trf.xlu0
    %v529 = vpop.trf.xlu0
    %v530 = vpop.trf.xlu0
    %v531 = vpop.trf.xlu0
    %v532 = vpop.trf.xlu0
    %v533 = vpop.trf.xlu0
    %v534 = vpop.trf.xlu0
    %v535 = vpop.trf.xlu0
    %v536 = vpop.trf.xlu0
    %v537 = vpop.trf.xlu0
    %v538 = vpop.trf.xlu0
    %v539 = vpop.trf.xlu0
    %v540 = vpop.trf.xlu0
    %v541 = vpop.trf.xlu0
    %v542 = vpop.trf.xlu0
    %v544 = vsel %vm203, %v527, 0
    %v547 = vsel %vm203, %v528, 0
    %549 = vmatprep.subr.mxu0 0.0
    %550 = vmatpush1.msra.mxu0 %v162
    %551 = vmatprep.subr.mxu0 0.0
    %552 = vmatpush1.msra.mxu0 0.0
    %553 = vmatprep.subr.mxu0 0.0
    %554 = vmatpush1.msra.mxu0 0.0
    %555 = vmatprep.subr.mxu0 0.0
    %556 = vmatpush1.msra.mxu0 0.0
    %557 = vmatprep.subr.mxu0 0.0
    %558 = vmatpush1.msra.mxu0 0.0
    %559 = vmatprep.subr.mxu0 0.0
    %560 = vmatpush1.msra.mxu0 0.0
    %561 = vmatprep.subr.mxu0 0.0
    %562 = vmatpush1.msra.mxu0 0.0
    %563 = vmatprep.subr.mxu0 0.0
    %564 = vmatpush1.msra.mxu0 0.0
    %565 = vmatprep.subr.mxu0 0.0
    %566 = vmatpush1.msra.mxu0 0.0
    %567 = vmatprep.subr.mxu0 0.0
    %568 = vmatpush1.msra.mxu0 0.0
    %569 = vmatprep.subr.mxu0 0.0
    %570 = vmatpush1.msra.mxu0 0.0
    %571 = vmatprep.subr.mxu0 0.0
    %572 = vmatpush1.msra.mxu0 0.0
    %573 = vmatprep.subr.mxu0 0.0
    %574 = vmatpush1.msra.mxu0 0.0
    %575 = vmatprep.subr.mxu0 0.0
    %576 = vmatpush1.msra.mxu0 0.0
    %577 = vmatprep.subr.mxu0 0.0
    %578 = vmatpush1.msra.mxu0 0.0
    %579 = vmatprep.subr.mxu0 0.0
    %580 = vmatpush1.msra.mxu0 0.0
    %581 = vmatprep.subr.mxu0 0.0
    %582 = vmatpush1.msra.mxu0 0.0
    %583 = vmatprep.subr.mxu0 0.0
    %584 = vmatpush1.msra.mxu0 0.0
    %585 = vmatprep.subr.mxu0 0.0
    %586 = vmatpush1.msra.mxu0 0.0
    %587 = vmatprep.subr.mxu0 0.0
    %588 = vmatpush1.msra.mxu0 0.0
    %589 = vmatprep.subr.mxu0 0.0
    %590 = vmatpush1.msra.mxu0 0.0
    %591 = vmatprep.subr.mxu0 0.0
    %592 = vmatpush1.msra.mxu0 0.0
    %593 = vmatprep.subr.mxu0 0.0
    %594 = vmatpush1.msra.mxu0 0.0
    %595 = vmatprep.subr.mxu0 0.0
    %596 = vmatpush1.msra.mxu0 0.0
    %597 = vmatprep.subr.mxu0 0.0
    %598 = vmatpush1.msra.mxu0 0.0
    %599 = vmatprep.subr.mxu0 0.0
    %600 = vmatpush1.msra.mxu0 0.0
    %601 = vmatprep.subr.mxu0 0.0
    %602 = vmatpush1.msra.mxu0 0.0
    %603 = vmatprep.subr.mxu0 0.0
    %604 = vmatpush1.msra.mxu0 0.0
    %605 = vmatprep.subr.mxu0 0.0
    %606 = vmatpush1.msra.mxu0 0.0
    %607 = vmatprep.subr.mxu0 0.0
    %608 = vmatpush1.msra.mxu0 0.0
    %609 = vmatprep.subr.mxu0 0.0
    %610 = vmatpush1.msra.mxu0 0.0
    %611 = vmatprep.subr.mxu0 0.0
    %612 = vmatpush1.msra.mxu0 0.0
    %613 = vmatprep.mubr.f32.mxu0 0.0
    %614 = vmatmul.mubr.f32.gmra.mrb[0].mxu0 %v544
    %v615 = vpop.f32.mrb[0].mxu0
    %v616 = vadd.f32 0.0, %v615
    %v617 = vpop.f32.mrb[0].mxu0
    %618 = vmatprep.mubr.f32.mxu0 0.0
    %619 = vmatmul.mubr.f32.gmra.mrb[0].mxu0 %v547
    %v620 = vpop.f32.mrb[0].mxu0
    %v621 = vadd.f32 0.0, %v620
    %v622 = vpop.f32.mrb[0].mxu0
    %623 = vdwg.mxu0
    %vm624 = vcmask 130048
    %v625 = vsel %vm624, %v277, -inf
    %v626 = vsel %vm624, %v282, -inf
    %v627 = vmax.f32 %v625, %v626
    %v628 = vrot.slane %v627, 4
    %v629 = vmax.f32 %v627, %v628
    %v630 = vrot.slane %v629, 2
    %v631 = vmax.f32 %v629, %v630
    %v632 = vrot.slane %v631, 1
    %v633 = vmax.f32 %v631, %v632
    %v634 = vsel %vm624, %v390, -inf
    %v635 = vsel %vm624, %v395, -inf
    %v636 = vmax.f32 %v634, %v635
    %v637 = vrot.slane %v636, 4
    %v638 = vmax.f32 %v636, %v637
    %v639 = vrot.slane %v638, 2
    %v640 = vmax.f32 %v638, %v639
    %v641 = vrot.slane %v640, 1
    %v642 = vmax.f32 %v640, %v641
    %v643 = vsel %vm624, %v503, -inf
    %v644 = vsel %vm624, %v508, -inf
    %v645 = vmax.f32 %v643, %v644
    %v646 = vrot.slane %v645, 4
    %v647 = vmax.f32 %v645, %v646
    %v648 = vrot.slane %v647, 2
    %v649 = vmax.f32 %v647, %v648
    %v650 = vrot.slane %v649, 1
    %v651 = vmax.f32 %v649, %v650
    %v652 = vsel %vm624, %v616, -inf
    %v653 = vsel %vm624, %v621, -inf
    %v654 = vmax.f32 %v652, %v653
    %v655 = vrot.slane %v654, 4
    %v656 = vmax.f32 %v654, %v655
    %v657 = vrot.slane %v656, 2
    %v658 = vmax.f32 %v656, %v657
    %v659 = vrot.slane %v658, 1
    %v660 = vmax.f32 %v658, %v659
    %v661 = vsub.f32 %v277, %v633
    %v662 = vsub.f32 %v282, %v633
    %v663 = vsub.f32 %v390, %v642
    %v664 = vsub.f32 %v395, %v642
    %v665 = vsub.f32 %v503, %v651
    %v666 = vsub.f32 %v508, %v651
    %v667 = vsub.f32 %v616, %v660
    %v668 = vsub.f32 %v621, %v660
    %v669 = vmul.f32 %v661, 1.442695
    %v670 = vpow.pop %v669
    %v671 = vmul.f32 %v662, 1.442695
    %v672 = vpow.pop %v671
    %v673 = vmul.f32 %v663, 1.442695
    %v674 = vpow.pop %v673
    %v675 = vmul.f32 %v664, 1.442695
    %v676 = vpow.pop %v675
    %v677 = vmul.f32 %v665, 1.442695
    %v678 = vpow.pop %v677
    %v679 = vmul.f32 %v666, 1.442695
    %v680 = vpow.pop %v679
    %v681 = vmul.f32 %v667, 1.442695
    %v682 = vpow.pop %v681
    %v683 = vmul.f32 %v668, 1.442695
    %v684 = vpow.pop %v683
    %v685 = vsel %vm624, %v670, 0.0
    %v686 = vsel %vm624, %v672, 0.0
    %v687 = vadd.f32 %v685, %v686
    %v688 = vrot.slane %v687, 4
    %v689 = vadd.f32 %v687, %v688
    %v690 = vrot.slane %v689, 2
    %v691 = vadd.f32 %v689, %v690
    %v692 = vrot.slane %v691, 1
    %v693 = vadd.f32 %v691, %v692
    %v694 = vsel %vm624, %v674, 0.0
    %v695 = vsel %vm624, %v676, 0.0
    %v696 = vadd.f32 %v694, %v695
    %v697 = vrot.slane %v696, 4
    %v698 = vadd.f32 %v696, %v697
    %v699 = vrot.slane %v698, 2
    %v700 = vadd.f32 %v698, %v699
    %v701 = vrot.slane %v700, 1
    %v702 = vadd.f32 %v700, %v701
    %v703 = vsel %vm624, %v678, 0.0
    %v704 = vsel %vm624, %v680, 0.0
    %v705 = vadd.f32 %v703, %v704
    %v706 = vrot.slane %v705, 4
    %v707 = vadd.f32 %v705, %v706
    %v708 = vrot.slane %v707, 2
    %v709 = vadd.f32 %v707, %v708
    %v710 = vrot.slane %v709, 1
    %v711 = vadd.f32 %v709, %v710
    %v712 = vsel %vm624, %v682, 0.0
    %v713 = vsel %vm624, %v684, 0.0
    %v714 = vadd.f32 %v712, %v713
    %v715 = vrot.slane %v714, 4
    %v716 = vadd.f32 %v714, %v715
    %v717 = vrot.slane %v716, 2
    %v718 = vadd.f32 %v716, %v717
    %v719 = vrot.slane %v718, 1
    %v720 = vadd.f32 %v718, %v719
    %v721 = vrcp.pop %v693
    %v722 = vrcp.pop %v702
    %v723 = vrcp.pop %v711
    %v724 = vrcp.pop %v720
    %v725 = vmul.f32 %v670, %v721
    %v726 = vmul.f32 %v672, %v721
    %v727 = vmul.f32 %v674, %v722
    %v728 = vmul.f32 %v676, %v722
    %v729 = vmul.f32 %v678, %v723
    %v730 = vmul.f32 %v680, %v723
    %v731 = vmul.f32 %v682, %v724
    %v732 = vmul.f32 %v684, %v724
    %v734 = vsel %vm624, %v167, 0
    %736 = vmatprep.subr.mxu0 0.0
    %737 = vmatpush1.msra.mxu0 %v725
    %738 = vmatprep.subr.mxu0 0.0
    %739 = vmatpush1.msra.mxu0 %v726
    %740 = vmatprep.subr.mxu0 0.0
    %741 = vmatpush1.msra.mxu0 0.0
    %742 = vmatprep.subr.mxu0 0.0
    %743 = vmatpush1.msra.mxu0 0.0
    %744 = vmatprep.subr.mxu0 0.0
    %745 = vmatpush1.msra.mxu0 0.0
    %746 = vmatprep.subr.mxu0 0.0
    %747 = vmatpush1.msra.mxu0 0.0
    %748 = vmatprep.subr.mxu0 0.0
    %749 = vmatpush1.msra.mxu0 0.0
    %750 = vmatprep.subr.mxu0 0.0
    %751 = vmatpush1.msra.mxu0 0.0
    %752 = vmatprep.subr.mxu0 0.0
    %753 = vmatpush1.msra.mxu0 0.0
    %754 = vmatprep.subr.mxu0 0.0
    %755 = vmatpush1.msra.mxu0 0.0
    %756 = vmatprep.subr.mxu0 0.0
    %757 = vmatpush1.msra.mxu0 0.0
    %758 = vmatprep.subr.mxu0 0.0
    %759 = vmatpush1.msra.mxu0 0.0
    %760 = vmatprep.subr.mxu0 0.0
    %761 = vmatpush1.msra.mxu0 0.0
    %762 = vmatprep.subr.mxu0 0.0
    %763 = vmatpush1.msra.mxu0 0.0
    %764 = vmatprep.subr.mxu0 0.0
    %765 = vmatpush1.msra.mxu0 0.0
    %766 = vmatprep.subr.mxu0 0.0
    %767 = vmatpush1.msra.mxu0 0.0
    %768 = vmatprep.subr.mxu0 0.0
    %769 = vmatpush1.msra.mxu0 0.0
    %770 = vmatprep.subr.mxu0 0.0
    %771 = vmatpush1.msra.mxu0 0.0
    %772 = vmatprep.subr.mxu0 0.0
    %773 = vmatpush1.msra.mxu0 0.0
    %774 = vmatprep.subr.mxu0 0.0
    %775 = vmatpush1.msra.mxu0 0.0
    %776 = vmatprep.subr.mxu0 0.0
    %777 = vmatpush1.msra.mxu0 0.0
    %778 = vmatprep.subr.mxu0 0.0
    %779 = vmatpush1.msra.mxu0 0.0
    %780 = vmatprep.subr.mxu0 0.0
    %781 = vmatpush1.msra.mxu0 0.0
    %782 = vmatprep.subr.mxu0 0.0
    %783 = vmatpush1.msra.mxu0 0.0
    %784 = vmatprep.subr.mxu0 0.0
    %785 = vmatpush1.msra.mxu0 0.0
    %786 = vmatprep.subr.mxu0 0.0
    %787 = vmatpush1.msra.mxu0 0.0
    %788 = vmatprep.subr.mxu0 0.0
    %789 = vmatpush1.msra.mxu0 0.0
    %790 = vmatprep.subr.mxu0 0.0
    %791 = vmatpush1.msra.mxu0 0.0
    %792 = vmatprep.subr.mxu0 0.0
    %793 = vmatpush1.msra.mxu0 0.0
    %794 = vmatprep.subr.mxu0 0.0
    %795 = vmatpush1.msra.mxu0 0.0
    %796 = vmatprep.subr.mxu0 0.0
    %797 = vmatpush1.msra.mxu0 0.0
    %798 = vmatprep.subr.mxu0 0.0
    %799 = vmatpush1.msra.mxu0 0.0
    %800 = vmatprep.mubr.f32.mxu0 0.0
    %801 = vmatmul.mubr.f32.gmra.mrb[0].mxu0 %v734
    %v802 = vpop.f32.mrb[0].mxu0
    %v803 = vadd.f32 0.0, %v802
    %v804 = vpop.f32.mrb[0].mxu0
    %805 = vdwg.mxu0
    %v807 = vsel %vm624, %v168, 0
    %809 = vmatprep.subr.mxu0 0.0
    %810 = vmatpush1.msra.mxu0 %v727
    %811 = vmatprep.subr.mxu0 0.0
    %812 = vmatpush1.msra.mxu0 %v728
    %813 = vmatprep.subr.mxu0 0.0
    %814 = vmatpush1.msra.mxu0 0.0
    %815 = vmatprep.subr.mxu0 0.0
    %816 = vmatpush1.msra.mxu0 0.0
    %817 = vmatprep.subr.mxu0 0.0
    %818 = vmatpush1.msra.mxu0 0.0
    %819 = vmatprep.subr.mxu0 0.0
    %820 = vmatpush1.msra.mxu0 0.0
    %821 = vmatprep.subr.mxu0 0.0
    %822 = vmatpush1.msra.mxu0 0.0
    %823 = vmatprep.subr.mxu0 0.0
    %824 = vmatpush1.msra.mxu0 0.0
    %825 = vmatprep.subr.mxu0 0.0
    %826 = vmatpush1.msra.mxu0 0.0
    %827 = vmatprep.subr.mxu0 0.0
    %828 = vmatpush1.msra.mxu0 0.0
    %829 = vmatprep.subr.mxu0 0.0
    %830 = vmatpush1.msra.mxu0 0.0
    %831 = vmatprep.subr.mxu0 0.0
    %832 = vmatpush1.msra.mxu0 0.0
    %833 = vmatprep.subr.mxu0 0.0
    %834 = vmatpush1.msra.mxu0 0.0
    %835 = vmatprep.subr.mxu0 0.0
    %836 = vmatpush1.msra.mxu0 0.0
    %837 = vmatprep.subr.mxu0 0.0
    %838 = vmatpush1.msra.mxu0 0.0
    %839 = vmatprep.subr.mxu0 0.0
    %840 = vmatpush1.msra.mxu0 0.0
    %841 = vmatprep.subr.mxu0 0.0
    %842 = vmatpush1.msra.mxu0 0.0
    %843 = vmatprep.subr.mxu0 0.0
    %844 = vmatpush1.msra.mxu0 0.0
    %845 = vmatprep.subr.mxu0 0.0
    %846 = vmatpush1.msra.mxu0 0.0
    %847 = vmatprep.subr.mxu0 0.0
    %848 = vmatpush1.msra.mxu0 0.0
    %849 = vmatprep.subr.mxu0 0.0
    %850 = vmatpush1.msra.mxu0 0.0
    %851 = vmatprep.subr.mxu0 0.0
    %852 = vmatpush1.msra.mxu0 0.0
    %853 = vmatprep.subr.mxu0 0.0
    %854 = vmatpush1.msra.mxu0 0.0
    %855 = vmatprep.subr.mxu0 0.0
    %856 = vmatpush1.msra.mxu0 0.0
    %857 = vmatprep.subr.mxu0 0.0
    %858 = vmatpush1.msra.mxu0 0.0
    %859 = vmatprep.subr.mxu0 0.0
    %860 = vmatpush1.msra.mxu0 0.0
    %861 = vmatprep.subr.mxu0 0.0
    %862 = vmatpush1.msra.mxu0 0.0
    %863 = vmatprep.subr.mxu0 0.0
    %864 = vmatpush1.msra.mxu0 0.0
    %865 = vmatprep.subr.mxu0 0.0
    %866 = vmatpush1.msra.mxu0 0.0
    %867 = vmatprep.subr.mxu0 0.0
    %868 = vmatpush1.msra.mxu0 0.0
    %869 = vmatprep.subr.mxu0 0.0
    %870 = vmatpush1.msra.mxu0 0.0
    %871 = vmatprep.subr.mxu0 0.0
    %872 = vmatpush1.msra.mxu0 0.0
    %873 = vmatprep.mubr.f32.mxu0 0.0
    %874 = vmatmul.mubr.f32.gmra.mrb[0].mxu0 %v807
    %v875 = vpop.f32.mrb[0].mxu0
    %v876 = vadd.f32 0.0, %v875
    %v877 = vpop.f32.mrb[0].mxu0
    %878 = vdwg.mxu0
    %v880 = vsel %vm624, %v169, 0
    %882 = vmatprep.subr.mxu0 0.0
    %883 = vmatpush1.msra.mxu0 %v729
    %884 = vmatprep.subr.mxu0 0.0
    %885 = vmatpush1.msra.mxu0 %v730
    %886 = vmatprep.subr.mxu0 0.0
    %887 = vmatpush1.msra.mxu0 0.0
    %888 = vmatprep.subr.mxu0 0.0
    %889 = vmatpush1.msra.mxu0 0.0
    %890 = vmatprep.subr.mxu0 0.0
    %891 = vmatpush1.msra.mxu0 0.0
    %892 = vmatprep.subr.mxu0 0.0
    %893 = vmatpush1.msra.mxu0 0.0
    %894 = vmatprep.subr.mxu0 0.0
    %895 = vmatpush1.msra.mxu0 0.0
    %896 = vmatprep.subr.mxu0 0.0
    %897 = vmatpush1.msra.mxu0 0.0
    %898 = vmatprep.subr.mxu0 0.0
    %899 = vmatpush1.msra.mxu0 0.0
    %900 = vmatprep.subr.mxu0 0.0
    %901 = vmatpush1.msra.mxu0 0.0
    %902 = vmatprep.subr.mxu0 0.0
    %903 = vmatpush1.msra.mxu0 0.0
    %904 = vmatprep.subr.mxu0 0.0
    %905 = vmatpush1.msra.mxu0 0.0
    %906 = vmatprep.subr.mxu0 0.0
    %907 = vmatpush1.msra.mxu0 0.0
    %908 = vmatprep.subr.mxu0 0.0
    %909 = vmatpush1.msra.mxu0 0.0
    %910 = vmatprep.subr.mxu0 0.0
    %911 = vmatpush1.msra.mxu0 0.0
    %912 = vmatprep.subr.mxu0 0.0
    %913 = vmatpush1.msra.mxu0 0.0
    %914 = vmatprep.subr.mxu0 0.0
    %915 = vmatpush1.msra.mxu0 0.0
    %916 = vmatprep.subr.mxu0 0.0
    %917 = vmatpush1.msra.mxu0 0.0
    %918 = vmatprep.subr.mxu0 0.0
    %919 = vmatpush1.msra.mxu0 0.0
    %920 = vmatprep.subr.mxu0 0.0
    %921 = vmatpush1.msra.mxu0 0.0
    %922 = vmatprep.subr.mxu0 0.0
    %923 = vmatpush1.msra.mxu0 0.0
    %924 = vmatprep.subr.mxu0 0.0
    %925 = vmatpush1.msra.mxu0 0.0
    %926 = vmatprep.subr.mxu0 0.0
    %927 = vmatpush1.msra.mxu0 0.0
    %928 = vmatprep.subr.mxu0 0.0
    %929 = vmatpush1.msra.mxu0 0.0
    %930 = vmatprep.subr.mxu0 0.0
    %931 = vmatpush1.msra.mxu0 0.0
    %932 = vmatprep.subr.mxu0 0.0
    %933 = vmatpush1.msra.mxu0 0.0
    %934 = vmatprep.subr.mxu0 0.0
    %935 = vmatpush1.msra.mxu0 0.0
    %936 = vmatprep.subr.mxu0 0.0
    %937 = vmatpush1.msra.mxu0 0.0
    %938 = vmatprep.subr.mxu0 0.0
    %939 = vmatpush1.msra.mxu0 0.0
    %940 = vmatprep.subr.mxu0 0.0
    %941 = vmatpush1.msra.mxu0 0.0
    %942 = vmatprep.subr.mxu0 0.0
    %943 = vmatpush1.msra.mxu0 0.0
    %944 = vmatprep.subr.mxu0 0.0
    %945 = vmatpush1.msra.mxu0 0.0
    %946 = vmatprep.mubr.f32.mxu0 0.0
    %947 = vmatmul.mubr.f32.gmra.mrb[0].mxu0 %v880
    %v948 = vpop.f32.mrb[0].mxu0
    %v949 = vadd.f32 0.0, %v948
    %v950 = vpop.f32.mrb[0].mxu0
    %951 = vdwg.mxu0
    %v953 = vsel %vm624, %v170, 0
    %955 = vmatprep.subr.mxu0 0.0
    %956 = vmatpush1.msra.mxu0 %v731
    %957 = vmatprep.subr.mxu0 0.0
    %958 = vmatpush1.msra.mxu0 %v732
    %959 = vmatprep.subr.mxu0 0.0
    %960 = vmatpush1.msra.mxu0 0.0
    %961 = vmatprep.subr.mxu0 0.0
    %962 = vmatpush1.msra.mxu0 0.0
    %963 = vmatprep.subr.mxu0 0.0
    %964 = vmatpush1.msra.mxu0 0.0
    %965 = vmatprep.subr.mxu0 0.0
    %966 = vmatpush1.msra.mxu0 0.0
    %967 = vmatprep.subr.mxu0 0.0
    %968 = vmatpush1.msra.mxu0 0.0
    %969 = vmatprep.subr.mxu0 0.0
    %970 = vmatpush1.msra.mxu0 0.0
    %971 = vmatprep.subr.mxu0 0.0
    %972 = vmatpush1.msra.mxu0 0.0
    %973 = vmatprep.subr.mxu0 0.0
    %974 = vmatpush1.msra.mxu0 0.0
    %975 = vmatprep.subr.mxu0 0.0
    %976 = vmatpush1.msra.mxu0 0.0
    %977 = vmatprep.subr.mxu0 0.0
    %978 = vmatpush1.msra.mxu0 0.0
    %979 = vmatprep.subr.mxu0 0.0
    %980 = vmatpush1.msra.mxu0 0.0
    %981 = vmatprep.subr.mxu0 0.0
    %982 = vmatpush1.msra.mxu0 0.0
    %983 = vmatprep.subr.mxu0 0.0
    %984 = vmatpush1.msra.mxu0 0.0
    %985 = vmatprep.subr.mxu0 0.0
    %986 = vmatpush1.msra.mxu0 0.0
    %987 = vmatprep.subr.mxu0 0.0
    %988 = vmatpush1.msra.mxu0 0.0
    %989 = vmatprep.subr.mxu0 0.0
    %990 = vmatpush1.msra.mxu0 0.0
    %991 = vmatprep.subr.mxu0 0.0
    %992 = vmatpush1.msra.mxu0 0.0
    %993 = vmatprep.subr.mxu0 0.0
    %994 = vmatpush1.msra.mxu0 0.0
    %995 = vmatprep.subr.mxu0 0.0
    %996 = vmatpush1.msra.mxu0 0.0
    %997 = vmatprep.subr.mxu0 0.0
    %998 = vmatpush1.msra.mxu0 0.0
    %999 = vmatprep.subr.mxu0 0.0
    %1000 = vmatpush1.msra.mxu0 0.0
    %1001 = vmatprep.subr.mxu0 0.0
    %1002 = vmatpush1.msra.mxu0 0.0
    %1003 = vmatprep.subr.mxu0 0.0
    %1004 = vmatpush1.msra.mxu0 0.0
    %1005 = vmatprep.subr.mxu0 0.0
    %1006 = vmatpush1.msra.mxu0 0.0
    %1007 = vmatprep.subr.mxu0 0.0
    %1008 = vmatpush1.msra.mxu0 0.0
    %1009 = vmatprep.subr.mxu0 0.0
    %1010 = vmatpush1.msra.mxu0 0.0
    %1011 = vmatprep.subr.mxu0 0.0
    %1012 = vmatpush1.msra.mxu0 0.0
    %1013 = vmatprep.subr.mxu0 0.0
    %1014 = vmatpush1.msra.mxu0 0.0
    %1015 = vmatprep.subr.mxu0 0.0
    %1016 = vmatpush1.msra.mxu0 0.0
    %1017 = vmatprep.subr.mxu0 0.0
    %1018 = vmatpush1.msra.mxu0 0.0
    %1019 = vmatprep.mubr.f32.mxu0 0.0
    %1020 = vmatmul.mubr.f32.gmra.mrb[0].mxu0 %v953
    %v1021 = vpop.f32.mrb[0].mxu0
    %v1022 = vadd.f32 0.0, %v1021
    %v1023 = vpop.f32.mrb[0].mxu0
    %1024 = vdwg.mxu0
    %1025 = vst.msk [vmem:[#allocation5] sm:$0xff] %vm624, %v803
    %1026 = vst.msk [vmem:[#allocation5 + $0x8] sm:$0xff] %vm624, %v876
    %1027 = vst.msk [vmem:[#allocation5 + $0x10] sm:$0xff] %vm624, %v949
    %1028 = vst.msk [vmem:[#allocation5 + $0x18] sm:$0xff] %vm624, %v1022
    // Predicated region
    $region128: #{tpu_custom_call.1} parent=1 // pred_check
      _
    $region129: #{tpu_custom_call.1} parent=1 // pred_check_branch
      %1030 = sbr.rel (0) target = $region131
    $region130: #{tpu_custom_call.1} parent=1 // pred_region
      %s1032 = ssub.s32 512, 512
      %1033 = vsyncadd [#allocation6], %s1032
      %s1034 = sshll.u32 [#allocation5], 4
      %s1035 = int_to_ptr.vmem [resolvable:$true] %s1034
      %1040 = dma.vmem_to_hbm [thread:$0]  %s1035, 512, %s3, [#allocation6], 128, 128, 8
    $region131: #{tpu_custom_call.1} parent=1 // pred_fallthru
      _
    // Predicated region
    $region132: #{tpu_custom_call.1} parent=1 // pred_check
      _
    $region133: #{tpu_custom_call.1} parent=1 // pred_check_branch
      %1042 = sbr.rel (0) target = $region135
    $region134: #{tpu_custom_call.1} parent=1 // pred_region
      %1043 = dma.done [#allocation6], 512
    $region135: #{tpu_custom_call.1} parent=1 // pred_fallthru
      _
    %1044 = vsyncpa [#allocation6], 1

</llo_original>
